<compile_context>
chip_gen: v7x
topology: tpu7x:2x2x1
jax: 0.10.0
libtpu: 0.0.40
codegen_flags: <defaults>
</compile_context>

<pallas_src>
import functools

import jax
import jax.numpy as jnp
from jax import lax
from jax.experimental import pallas as pl
from jax.experimental.pallas import tpu as pltpu


_RAY_TILE_MAX = 8192    # rows of batch_rays / color streamed per grid step
_W_TILE_MAX = 2048      # rows of the lane-dense (rows, 128) skinning stream
_SMOOTH_L1_BETA = 0.1   # matches nn.SmoothL1Loss(beta=0.1)


# ------------------------------ helpers ------------------------------------ #

def _round_up(x, m):
    return ((x + m - 1) // m) * m


def _pad_rows(x, rows):
    n = x.shape[0]
    if n == rows:
        return x
    pad = [(0, rows - n)] + [(0, 0)] * (x.ndim - 1)
    return jnp.pad(x, pad)


def _lane_dense(x, rows):
    """Flatten x into a zero-padded, lane-dense (rows, 128) layout."""
    total = x.size
    flat = x.reshape(-1)
    pad = rows * 128 - total
    if pad:
        flat = jnp.pad(flat, (0, pad))
    return flat.reshape(rows, 128)


# ------------------------------ Pallas kernel ------------------------------- #

def _idhr_sums_kernel(rays_ref, color_ref, wp_ref, wg_ref,
                      out_ref,
                      l1_acc, sq_acc, sm_acc, sk_acc,
                      *, n_ray_tiles, n_w_tiles):
    """Fused masked-color (L1 / MSE / smooth-L1) + skinning |dW| sums.

    Two independent row-tiled streams share one 'arbitrary' reduction grid
    axis; each step adds vector partial sums into VMEM scratch; the final
    cross-lane reduce + packed lane-dense store happens once on the last step.
    Output lanes 0..3 of row 0 hold [l1_sum, sq_sum, smooth_l1_sum, sk_sum].
    """
    i = pl.program_id(0)

    @pl.when(i == 0)
    def _init():
        l1_acc[...] = jnp.zeros_like(l1_acc)
        sq_acc[...] = jnp.zeros_like(sq_acc)
        sm_acc[...] = jnp.zeros_like(sm_acc)
        sk_acc[...] = jnp.zeros_like(sk_acc)

    @pl.when(i < n_ray_tiles)
    def _color():
        rays = rays_ref[...].astype(jnp.float32)     # (rt, >=10), upcast in-kernel
        pre = color_ref[...].astype(jnp.float32)     # (rt, 3)
        gt = rays[:, 6:9]                            # gt color columns
        m = rays[:, 9:10]                            # fg mask, broadcasts over RGB
        diff = (pre - gt) * m
        ad = jnp.abs(diff)
        sq = diff * diff
        sm = jnp.where(ad < _SMOOTH_L1_BETA,
                       (0.5 / _SMOOTH_L1_BETA) * sq,
                       ad - 0.5 * _SMOOTH_L1_BETA)
        l1_acc[...] += jnp.sum(ad, axis=0, keepdims=True)   # (1, 3) partials
        sq_acc[...] += jnp.sum(sq, axis=0, keepdims=True)
        sm_acc[...] += jnp.sum(sm, axis=0, keepdims=True)

    @pl.when(i < n_w_tiles)
    def _skin():
        d = wp_ref[...].astype(jnp.float32) - wg_ref[...].astype(jnp.float32)
        sk_acc[...] += jnp.sum(jnp.abs(d), axis=0, keepdims=True)   # (1, 128)

    @pl.when(i == pl.num_programs(0) - 1)
    def _finalize():
        l1 = jnp.sum(l1_acc[...])
        sq = jnp.sum(sq_acc[...])
        sm = jnp.sum(sm_acc[...])
        sk = jnp.sum(sk_acc[...])
        # Pack the four scalars lane-dense into one (8, 128) block -> single
        # full-width unmasked store + one output DMA.
        lane = lax.broadcasted_iota(jnp.int32, (8, 128), 1)
        out_ref[...] = jnp.where(lane == 0, l1,
                       jnp.where(lane == 1, sq,
                       jnp.where(lane == 2, sm,
                       jnp.where(lane == 3, sk, 0.0))))


def _idhr_loss_sums(rays, color_pre, w_pre=None, w_gt=None):
    """Returns (l1_sum, sq_sum, smooth_l1_sum, skinning_abs_sum) as f32 scalars.

    rays:      (N, C>=10)  = batch_rays[0]; cols 6:9 = gt color, col 9 = mask.
    color_pre: (N, 3) predicted color.
    w_pre/gt:  (N_pts, J) skinning weights, or None to skip that stream.
    """
    n_rays, n_cols = rays.shape
    assert n_cols >= 10 and color_pre.shape == (n_rays, 3)

    # Ray/color stream: one big tile when it fits, else 8192-row tiles.
    if n_rays <= _RAY_TILE_MAX:
        ray_tile = _round_up(max(n_rays, 8), 8)
    else:
        ray_tile = _RAY_TILE_MAX
    n_rays_pad = _round_up(n_rays, ray_tile)
    rays_p = _pad_rows(rays, n_rays_pad)          # zero rows -> mask 0 -> no effect
    color_p = _pad_rows(color_pre, n_rays_pad)
    n_ray_tiles = n_rays_pad // ray_tile

    # Skinning stream: lane-dense repack (N_pts, J) -> (rows, 128).
    if w_pre is None:
        w_pre_p = jnp.zeros((8, 128), jnp.float32)
        w_gt_p = w_pre_p
        w_tile, n_w_tiles = 8, 1
    else:
        rows_raw = -(-w_pre.size // 128)
        if rows_raw <= _W_TILE_MAX:
            w_tile = _round_up(max(rows_raw, 8), 8)
            rows = w_tile
        else:
            w_tile = _W_TILE_MAX
            rows = _round_up(rows_raw, w_tile)
        w_pre_p = _lane_dense(w_pre, rows)        # zero padding -> |0-0| = 0
        w_gt_p = _lane_dense(w_gt, rows)
        n_w_tiles = rows // w_tile

    grid = (max(n_ray_tiles, n_w_tiles),)
    kernel = functools.partial(_idhr_sums_kernel,
                               n_ray_tiles=n_ray_tiles, n_w_tiles=n_w_tiles)

    ray_map = lambda i: (jnp.minimum(i, n_ray_tiles - 1), 0)
    w_map = lambda i: (jnp.minimum(i, n_w_tiles - 1), 0)

    out = pl.pallas_call(
        kernel,
        out_shape=jax.ShapeDtypeStruct((8, 128), jnp.float32),
        grid_spec=pltpu.PrefetchScalarGridSpec(
            num_scalar_prefetch=0,
            grid=grid,
            in_specs=[pl.BlockSpec((ray_tile, n_cols), ray_map),
                      pl.BlockSpec((ray_tile, 3), ray_map),
                      pl.BlockSpec((w_tile, 128), w_map),
                      pl.BlockSpec((w_tile, 128), w_map)],
            out_specs=pl.BlockSpec((8, 128), lambda i: (0, 0)),
            scratch_shapes=[pltpu.VMEM((1, 3), jnp.float32),
                            pltpu.VMEM((1, 3), jnp.float32),
                            pltpu.VMEM((1, 3), jnp.float32),
                            pltpu.VMEM((1, 128), jnp.float32)]),
        compiler_params=pltpu.CompilerParams(
            dimension_semantics=("arbitrary",)),
    )(rays_p, color_p, w_pre_p, w_gt_p)
    return out[0, 0], out[0, 1], out[0, 2], out[0, 3]


# ------------------------------ Loss wrapper -------------------------------- #

class IDHRLossPallas:
    """JAX / Pallas port of IDHRLoss.forward (non-perceptual color branch)."""

    def __init__(self, rgb_weight=0.0, perceptual_weight=0.0, mse_weight=0.0,
                 nssim_weight=0.0, eikonal_weight=0.0, mask_weight=0.0,
                 skinning_weight=0.0, params_weight=0.0, pose_refine_weight=0.0,
                 rgb_loss_type='l1', weight_decay_end=1e10,
                 kick_out_iter_skinning=100000, **kwargs):
        if rgb_loss_type not in ('l1', 'mse', 'smoothed_l1'):
            raise ValueError('Unsupported RGB loss type: {}'.format(rgb_loss_type))
        self.rgb_weight = rgb_weight
        self.perceptual_weight = perceptual_weight
        self.mse_weight = mse_weight
        self.nssim_weight = nssim_weight
        self.eikonal_weight = eikonal_weight
        self.mask_weight = mask_weight
        self.skinning_weight = skinning_weight
        self.params_weight = params_weight
        self.pose_refine_weight = pose_refine_weight
        self.rgb_loss_type = rgb_loss_type
        self.weight_decay_end = weight_decay_end
        self.kick_out_iter_skinning = kick_out_iter_skinning
        # TODO(synk): LPIPS perceptual loss, SSIM loss and the SDF mask loss
        # (get_intersection_mask) have no clean Pallas equivalent here; their
        # weights must stay at 0.

    def weight_decay_factor(self, iter_step):
        return max(1.0 - iter_step / self.weight_decay_end, 0.0)

    def __call__(self, model_outputs, ground_truth, iter_step, sdf_params=None):
        skinning_weight = self.skinning_weight * self.weight_decay_factor(iter_step)

        batch_rays = ground_truth['batch_rays']
        rays2d = batch_rays[0]                       # (N, >=10), native dtype
        color_pre = model_outputs['color']           # (N, 3), native dtype

        pts_w_gt = model_outputs['pts_W_sampled']
        pts_w_pre = model_outputs['pts_W_pred']
        gradient_error = model_outputs['gradient_error']
        pose_refine_error = model_outputs['pose_refine_error']

        zero = jnp.zeros((1,), jnp.float32)

        need_color = (self.rgb_weight > 0) or (self.mse_weight > 0)
        need_sk = (self.skinning_weight > 0 and pts_w_pre is not None
                   and iter_step < self.kick_out_iter_skinning)

        loss_color = zero
        loss_mse = zero
        loss_skinning_weights = zero
        if need_color or need_sk:
            l1_sum, sq_sum, sm_sum, sk_sum = _idhr_loss_sums(
                rays2d, color_pre,
                pts_w_pre if need_sk else None,
                pts_w_gt if need_sk else None)
            n_color_elems = float(color_pre.shape[0] * color_pre.shape[1])
            if self.rgb_weight > 0:
                base = {'l1': l1_sum, 'mse': sq_sum,
                        'smoothed_l1': sm_sum}[self.rgb_loss_type]
                loss_color = (base / n_color_elems).reshape(1)
            if self.mse_weight > 0:
                loss_mse = (sq_sum / n_color_elems).reshape(1)
            if need_sk:
                loss_skinning_weights = (
                    sk_sum / float(pts_w_pre.shape[0])).reshape(1)

        loss_pips = zero      # perceptual branch not supported (TODO above)
        loss_nssim = zero     # SSIM branch not supported (TODO above)
        loss_mask = zero      # SDF mask branch not supported (TODO above)

        if self.eikonal_weight > 0:
            loss_eikonal = jnp.asarray(gradient_error, jnp.float32).reshape(1)
        else:
            loss_eikonal = zero

        if self.params_weight > 0 and sdf_params is not None:
            sdf_cat = jnp.concatenate(sdf_params, axis=1).astype(jnp.float32)
            n_params = sdf_cat.shape[-1]
            loss_params = (jnp.mean(jnp.linalg.norm(sdf_cat, axis=-1))
                           / n_params).reshape(1)
        else:
            loss_params = zero

        if self.pose_refine_weight > 0 and pose_refine_error is not None:
            loss_pose_refine = jnp.asarray(pose_refine_error,
                                           jnp.float32).reshape(1)
        else:
            loss_pose_refine = zero

        loss_color = loss_color * self.rgb_weight
        loss_pips = loss_pips * self.perceptual_weight
        loss_mse = loss_mse * self.mse_weight
        loss_nssim = loss_nssim * self.nssim_weight
        loss_skinning_weights = loss_skinning_weights * skinning_weight
        loss_eikonal = loss_eikonal * self.eikonal_weight
        loss_mask = loss_mask * self.mask_weight
        loss_params = loss_params * self.params_weight
        loss_pose_refine = loss_pose_refine * self.pose_refine_weight

        loss = (loss_color + loss_pips + loss_mse + loss_nssim
                + loss_skinning_weights + loss_eikonal + loss_mask
                + loss_params + loss_pose_refine)

        return {'loss': loss, 'loss_color': loss_color, 'loss_pips': loss_pips,
                'loss_mse': loss_mse, 'loss_nssim': loss_nssim,
                'loss_skinning_weights': loss_skinning_weights,
                'loss_eikonal': loss_eikonal, 'loss_mask': loss_mask,
                'loss_params': loss_params,
                'loss_pose_refine': loss_pose_refine}


# ---------------------------------- Demo ------------------------------------ #

if __name__ == "__main__":
    key = jax.random.PRNGKey(0)
    k1, k2, k3, k4, k5 = jax.random.split(key, 5)

    N_RAYS = 300     # deliberately not a multiple of 8/128 (padding path)
    N_PTS = 200      # number of sampled points for skinning weights
    N_JOINTS = 24

    # batch_rays: [1, N, 10] — cols 6:9 are gt color, col 9 is fg/occ mask.
    rays_rgb = jax.random.uniform(k1, (1, N_RAYS, 3), jnp.float32)
    rays_misc = jax.random.uniform(k2, (1, N_RAYS, 6), jnp.float32)
    fg = (jax.random.uniform(k3, (1, N_RAYS, 1)) > 0.5).astype(jnp.float32)
    batch_rays = jnp.concatenate([rays_misc, rays_rgb, fg], axis=-1)

    color_pre = jax.random.uniform(k4, (N_RAYS, 3), jnp.float32)
    kw1, kw2 = jax.random.split(k5)
    pts_W_sampled = jax.nn.softmax(jax.random.normal(kw1, (N_PTS, N_JOINTS)), -1)
    pts_W_pred = jax.nn.softmax(jax.random.normal(kw2, (N_PTS, N_JOINTS)), -1)

    gradient_error = jnp.float32(0.123)
    pose_refine_error = jnp.float32(0.045)

    model_outputs = {'color': color_pre,
                     'pts_W_sampled': pts_W_sampled,
                     'pts_W_pred': pts_W_pred,
                     'gradient_error': gradient_error,
                     'pose_refine_error': pose_refine_error}
    ground_truth = {'batch_rays': batch_rays}

    loss_fn = IDHRLossPallas(rgb_weight=1.0, mse_weight=0.5, eikonal_weight=0.1,
                             skinning_weight=0.2, pose_refine_weight=0.05,
                             rgb_loss_type='l1')

    iter_step = 1000
    results = jax.block_until_ready(loss_fn(model_outputs, ground_truth, iter_step))

    # Pure-JAX reference check of the same math.
    fg_m = batch_rays[0, :, 9:10]
    cp = color_pre * fg_m
    cg = batch_rays[0, :, 6:9] * fg_m
    decay = max(1.0 - iter_step / loss_fn.weight_decay_end, 0.0)
    ref_color = jnp.mean(jnp.abs(cp - cg)) * 1.0
    ref_mse = jnp.mean((cp - cg) ** 2) * 0.5
    ref_sk = jnp.mean(jnp.sum(jnp.abs(pts_W_pred - pts_W_sampled), -1)) * 0.2 * decay
    ref_eik = gradient_error * 0.1
    ref_pose = pose_refine_error * 0.05
    ref_total = ref_color + ref_mse + ref_sk + ref_eik + ref_pose

    assert jnp.allclose(results['loss_color'][0], ref_color, rtol=1e-5, atol=1e-6)
    assert jnp.allclose(results['loss_mse'][0], ref_mse, rtol=1e-5, atol=1e-6)
    assert jnp.allclose(results['loss_skinning_weights'][0], ref_sk,
                        rtol=1e-5, atol=1e-6)
    assert jnp.allclose(results['loss'][0], ref_total, rtol=1e-5, atol=1e-6)

    # smoothed_l1 variant (SmoothL1Loss, beta=0.1); also exercises the
    # skinning-disabled dummy stream path.
    loss_fn_sm = IDHRLossPallas(rgb_weight=1.0, rgb_loss_type='smoothed_l1')
    res_sm = jax.block_until_ready(loss_fn_sm(model_outputs, ground_truth, iter_step))
    d = cp - cg
    ad = jnp.abs(d)
    ref_sm = jnp.mean(jnp.where(ad < 0.1, 0.5 * d * d / 0.1, ad - 0.05))
    assert jnp.allclose(res_sm['loss_color'][0], ref_sm, rtol=1e-5, atol=1e-6)

    print("KERNEL_OK")
</pallas_src>

<mosaic_0001>
module attributes {stable_mosaic.version = 11 : i64} {
  func.func @_idhr_sums_kernel(%arg0: i32, %arg1: memref<304x10xf32, #tpu.memory_space<vmem>>, %arg2: memref<304x3xf32, #tpu.memory_space<vmem>>, %arg3: memref<40x128xf32, #tpu.memory_space<vmem>>, %arg4: memref<40x128xf32, #tpu.memory_space<vmem>>, %arg5: memref<8x128xf32, #tpu.memory_space<vmem>>, %arg6: memref<1x3xf32, #tpu.memory_space<vmem>>, %arg7: memref<1x3xf32, #tpu.memory_space<vmem>>, %arg8: memref<1x3xf32, #tpu.memory_space<vmem>>, %arg9: memref<1x128xf32, #tpu.memory_space<vmem>>) attributes {dimension_semantics = [#tpu.dimension_semantics<arbitrary>], iteration_bounds = array<i64: 1>, scalar_prefetch = 0 : i64, scratch_operands = 4 : i64, tpu.core_type = #tpu.core_type<tc>, window_params = [{transform_indices = @transform_0, window_bounds = array<i64: 304, 10>}, {transform_indices = @transform_1, window_bounds = array<i64: 304, 3>}, {transform_indices = @transform_2, window_bounds = array<i64: 40, 128>}, {transform_indices = @transform_3, window_bounds = array<i64: 40, 128>}, {pipeline_mode = #tpu.pipeline_mode<synchronous>, transform_indices = @transform_4, window_bounds = array<i64: 8, 128>}]} {
    %c0_i32 = arith.constant 0 : i32
    %0 = arith.cmpi eq, %arg0, %c0_i32 : i32
    %1 = arith.extui %0 : i1 to i32
    %c0_i32_0 = arith.constant 0 : i32
    %2 = arith.cmpi ne, %1, %c0_i32_0 : i32
    scf.if %2 {
      %cst = arith.constant 0.000000e+00 : f32
      %12 = vector.broadcast %cst : f32 to vector<1x3xf32>
      %c0 = arith.constant 0 : index
      %c0_6 = arith.constant 0 : index
      %13 = vector.load %arg6[%c0, %c0_6] : memref<1x3xf32, #tpu.memory_space<vmem>>, vector<1x3xf32>
      tpu.vector_store %arg6[%c0, %c0_6], %12 {strides = array<i32>} : memref<1x3xf32, #tpu.memory_space<vmem>>, vector<1x3xf32>,
      %cst_7 = arith.constant 0.000000e+00 : f32
      %14 = vector.broadcast %cst_7 : f32 to vector<1x3xf32>
      %c0_8 = arith.constant 0 : index
      %c0_9 = arith.constant 0 : index
      %15 = vector.load %arg7[%c0_8, %c0_9] : memref<1x3xf32, #tpu.memory_space<vmem>>, vector<1x3xf32>
      tpu.vector_store %arg7[%c0_8, %c0_9], %14 {strides = array<i32>} : memref<1x3xf32, #tpu.memory_space<vmem>>, vector<1x3xf32>,
      %cst_10 = arith.constant 0.000000e+00 : f32
      %16 = vector.broadcast %cst_10 : f32 to vector<1x3xf32>
      %c0_11 = arith.constant 0 : index
      %c0_12 = arith.constant 0 : index
      %17 = vector.load %arg8[%c0_11, %c0_12] : memref<1x3xf32, #tpu.memory_space<vmem>>, vector<1x3xf32>
      tpu.vector_store %arg8[%c0_11, %c0_12], %16 {strides = array<i32>} : memref<1x3xf32, #tpu.memory_space<vmem>>, vector<1x3xf32>,
      %cst_13 = arith.constant 0.000000e+00 : f32
      %18 = vector.broadcast %cst_13 : f32 to vector<1x128xf32>
      %c0_14 = arith.constant 0 : index
      %c0_15 = arith.constant 0 : index
      %19 = vector.load %arg9[%c0_14, %c0_15] : memref<1x128xf32, #tpu.memory_space<vmem>>, vector<1x128xf32>
      tpu.vector_store %arg9[%c0_14, %c0_15], %18 {strides = array<i32>} : memref<1x128xf32, #tpu.memory_space<vmem>>, vector<1x128xf32>,
    } else {
    }
    %c1_i32 = arith.constant 1 : i32
    %3 = arith.cmpi slt, %arg0, %c1_i32 : i32
    %4 = arith.extui %3 : i1 to i32
    %c0_i32_1 = arith.constant 0 : i32
    %5 = arith.cmpi ne, %4, %c0_i32_1 : i32
    scf.if %5 {
      %c0 = arith.constant 0 : index
      %c0_6 = arith.constant 0 : index
      %12 = vector.load %arg1[%c0, %c0_6] : memref<304x10xf32, #tpu.memory_space<vmem>>, vector<304x10xf32>
      %c0_7 = arith.constant 0 : index
      %c0_8 = arith.constant 0 : index
      %13 = vector.load %arg2[%c0_7, %c0_8] : memref<304x3xf32, #tpu.memory_space<vmem>>, vector<304x3xf32>
      %14 = vector.extract_strided_slice %12 {offsets = [0, 6], sizes = [304, 3], strides = [1, 1]} : vector<304x10xf32> to vector<304x3xf32>
      %15 = vector.extract_strided_slice %12 {offsets = [0, 9], sizes = [304, 1], strides = [1, 1]} : vector<304x10xf32> to vector<304x1xf32>
      %16 = arith.subf %13, %14 : vector<304x3xf32>
      %17 = vector.broadcast %15 : vector<304x1xf32> to vector<304x3xf32>
      %18 = arith.mulf %16, %17 : vector<304x3xf32>
      %19 = math.absf %18 : vector<304x3xf32>
      %20 = arith.mulf %18, %18 : vector<304x3xf32>
      %cst = arith.constant 1.000000e-01 : f32
      %21 = vector.broadcast %cst : f32 to vector<304x3xf32>
      %22 = arith.cmpf olt, %19, %21 : vector<304x3xf32>
      %cst_9 = arith.constant 5.000000e+00 : f32
      %23 = vector.broadcast %cst_9 : f32 to vector<304x3xf32>
      %24 = arith.mulf %23, %20 : vector<304x3xf32>
      %cst_10 = arith.constant 5.000000e-02 : f32
      %25 = vector.broadcast %cst_10 : f32 to vector<304x3xf32>
      %26 = arith.subf %19, %25 : vector<304x3xf32>
      %27 = arith.select %22, %24, %26 : vector<304x3xi1>, vector<304x3xf32>
      %c0_11 = arith.constant 0 : index
      %c0_12 = arith.constant 0 : index
      %28 = vector.load %arg6[%c0_11, %c0_12] : memref<1x3xf32, #tpu.memory_space<vmem>>, vector<1x3xf32>
      %cst_13 = arith.constant dense<0.000000e+00> : vector<3xf32>
      %29 = vector.multi_reduction <add>, %19, %cst_13 [0] : vector<304x3xf32> to vector<3xf32>
      %30 = vector.shape_cast %29 : vector<3xf32> to vector<1x3xf32>
      %31 = arith.addf %28, %30 : vector<1x3xf32>
      %c0_14 = arith.constant 0 : index
      %c0_15 = arith.constant 0 : index
      %32 = vector.load %arg6[%c0_14, %c0_15] : memref<1x3xf32, #tpu.memory_space<vmem>>, vector<1x3xf32>
      tpu.vector_store %arg6[%c0_14, %c0_15], %31 {strides = array<i32>} : memref<1x3xf32, #tpu.memory_space<vmem>>, vector<1x3xf32>,
      %c0_16 = arith.constant 0 : index
      %c0_17 = arith.constant 0 : index
      %33 = vector.load %arg7[%c0_16, %c0_17] : memref<1x3xf32, #tpu.memory_space<vmem>>, vector<1x3xf32>
      %cst_18 = arith.constant dense<0.000000e+00> : vector<3xf32>
      %34 = vector.multi_reduction <add>, %20, %cst_18 [0] : vector<304x3xf32> to vector<3xf32>
      %35 = vector.shape_cast %34 : vector<3xf32> to vector<1x3xf32>
      %36 = arith.addf %33, %35 : vector<1x3xf32>
      %c0_19 = arith.constant 0 : index
      %c0_20 = arith.constant 0 : index
      %37 = vector.load %arg7[%c0_19, %c0_20] : memref<1x3xf32, #tpu.memory_space<vmem>>, vector<1x3xf32>
      tpu.vector_store %arg7[%c0_19, %c0_20], %36 {strides = array<i32>} : memref<1x3xf32, #tpu.memory_space<vmem>>, vector<1x3xf32>,
      %c0_21 = arith.constant 0 : index
      %c0_22 = arith.constant 0 : index
      %38 = vector.load %arg8[%c0_21, %c0_22] : memref<1x3xf32, #tpu.memory_space<vmem>>, vector<1x3xf32>
      %cst_23 = arith.constant dense<0.000000e+00> : vector<3xf32>
      %39 = vector.multi_reduction <add>, %27, %cst_23 [0] : vector<304x3xf32> to vector<3xf32>
      %40 = vector.shape_cast %39 : vector<3xf32> to vector<1x3xf32>
      %41 = arith.addf %38, %40 : vector<1x3xf32>
      %c0_24 = arith.constant 0 : index
      %c0_25 = arith.constant 0 : index
      %42 = vector.load %arg8[%c0_24, %c0_25] : memref<1x3xf32, #tpu.memory_space<vmem>>, vector<1x3xf32>
      tpu.vector_store %arg8[%c0_24, %c0_25], %41 {strides = array<i32>} : memref<1x3xf32, #tpu.memory_space<vmem>>, vector<1x3xf32>,
    } else {
    }
    %c1_i32_2 = arith.constant 1 : i32
    %6 = arith.cmpi slt, %arg0, %c1_i32_2 : i32
    %7 = arith.extui %6 : i1 to i32
    %c0_i32_3 = arith.constant 0 : i32
    %8 = arith.cmpi ne, %7, %c0_i32_3 : i32
    scf.if %8 {
      %c0 = arith.constant 0 : index
      %c0_6 = arith.constant 0 : index
      %12 = vector.load %arg3[%c0, %c0_6] : memref<40x128xf32, #tpu.memory_space<vmem>>, vector<40x128xf32>
      %c0_7 = arith.constant 0 : index
      %c0_8 = arith.constant 0 : index
      %13 = vector.load %arg4[%c0_7, %c0_8] : memref<40x128xf32, #tpu.memory_space<vmem>>, vector<40x128xf32>
      %14 = arith.subf %12, %13 : vector<40x128xf32>
      %c0_9 = arith.constant 0 : index
      %c0_10 = arith.constant 0 : index
      %15 = vector.load %arg9[%c0_9, %c0_10] : memref<1x128xf32, #tpu.memory_space<vmem>>, vector<1x128xf32>
      %16 = math.absf %14 : vector<40x128xf32>
      %cst = arith.constant dense<0.000000e+00> : vector<128xf32>
      %17 = vector.multi_reduction <add>, %16, %cst [0] : vector<40x128xf32> to vector<128xf32>
      %18 = vector.shape_cast %17 : vector<128xf32> to vector<1x128xf32>
      %19 = arith.addf %15, %18 : vector<1x128xf32>
      %c0_11 = arith.constant 0 : index
      %c0_12 = arith.constant 0 : index
      %20 = vector.load %arg9[%c0_11, %c0_12] : memref<1x128xf32, #tpu.memory_space<vmem>>, vector<1x128xf32>
      tpu.vector_store %arg9[%c0_11, %c0_12], %19 {strides = array<i32>} : memref<1x128xf32, #tpu.memory_space<vmem>>, vector<1x128xf32>,
    } else {
    }
    %c0_i32_4 = arith.constant 0 : i32
    %9 = arith.cmpi eq, %arg0, %c0_i32_4 : i32
    %10 = arith.extui %9 : i1 to i32
    %c0_i32_5 = arith.constant 0 : i32
    %11 = arith.cmpi ne, %10, %c0_i32_5 : i32
    scf.if %11 {
      %c0 = arith.constant 0 : index
      %c0_6 = arith.constant 0 : index
      %12 = vector.load %arg6[%c0, %c0_6] : memref<1x3xf32, #tpu.memory_space<vmem>>, vector<1x3xf32>
      %13 = vector.shape_cast %12 : vector<1x3xf32> to vector<1x1x3xf32>
      %cst = arith.constant dense<0.000000e+00> : vector<1xf32>
      %14 = vector.multi_reduction <add>, %13, %cst [1, 2] : vector<1x1x3xf32> to vector<1xf32>
      %15 = vector.shape_cast %14 : vector<1xf32> to vector<1x1x1xf32>
      %16 = vector.extract %15[0, 0, 0] : f32 from vector<1x1x1xf32>
      %c0_7 = arith.constant 0 : index
      %c0_8 = arith.constant 0 : index
      %17 = vector.load %arg7[%c0_7, %c0_8] : memref<1x3xf32, #tpu.memory_space<vmem>>, vector<1x3xf32>
      %18 = vector.shape_cast %17 : vector<1x3xf32> to vector<1x1x3xf32>
      %cst_9 = arith.constant dense<0.000000e+00> : vector<1xf32>
      %19 = vector.multi_reduction <add>, %18, %cst_9 [1, 2] : vector<1x1x3xf32> to vector<1xf32>
      %20 = vector.shape_cast %19 : vector<1xf32> to vector<1x1x1xf32>
      %21 = vector.extract %20[0, 0, 0] : f32 from vector<1x1x1xf32>
      %c0_10 = arith.constant 0 : index
      %c0_11 = arith.constant 0 : index
      %22 = vector.load %arg8[%c0_10, %c0_11] : memref<1x3xf32, #tpu.memory_space<vmem>>, vector<1x3xf32>
      %23 = vector.shape_cast %22 : vector<1x3xf32> to vector<1x1x3xf32>
      %cst_12 = arith.constant dense<0.000000e+00> : vector<1xf32>
      %24 = vector.multi_reduction <add>, %23, %cst_12 [1, 2] : vector<1x1x3xf32> to vector<1xf32>
      %25 = vector.shape_cast %24 : vector<1xf32> to vector<1x1x1xf32>
      %26 = vector.extract %25[0, 0, 0] : f32 from vector<1x1x1xf32>
      %c0_13 = arith.constant 0 : index
      %c0_14 = arith.constant 0 : index
      %27 = vector.load %arg9[%c0_13, %c0_14] : memref<1x128xf32, #tpu.memory_space<vmem>>, vector<1x128xf32>
      %28 = vector.shape_cast %27 : vector<1x128xf32> to vector<1x1x128xf32>
      %cst_15 = arith.constant dense<0.000000e+00> : vector<1xf32>
      %29 = vector.multi_reduction <add>, %28, %cst_15 [1, 2] : vector<1x1x128xf32> to vector<1xf32>
      %30 = vector.shape_cast %29 : vector<1xf32> to vector<1x1x1xf32>
      %31 = vector.extract %30[0, 0, 0] : f32 from vector<1x1x1xf32>
      %32 = tpu.iota {dimensions = array<i32: 1>} : vector<8x128xi32>
      %c0_i32_16 = arith.constant 0 : i32
      %33 = vector.broadcast %c0_i32_16 : i32 to vector<8x128xi32>
      %34 = arith.cmpi eq, %32, %33 : vector<8x128xi32>
      %c1_i32_17 = arith.constant 1 : i32
      %35 = vector.broadcast %c1_i32_17 : i32 to vector<8x128xi32>
      %36 = arith.cmpi eq, %32, %35 : vector<8x128xi32>
      %c2_i32 = arith.constant 2 : i32
      %37 = vector.broadcast %c2_i32 : i32 to vector<8x128xi32>
      %38 = arith.cmpi eq, %32, %37 : vector<8x128xi32>
      %c3_i32 = arith.constant 3 : i32
      %39 = vector.broadcast %c3_i32 : i32 to vector<8x128xi32>
      %40 = arith.cmpi eq, %32, %39 : vector<8x128xi32>
      %cst_18 = arith.constant 0.000000e+00 : f32
      %41 = vector.broadcast %31 : f32 to vector<8x128xf32>
      %42 = vector.broadcast %cst_18 : f32 to vector<8x128xf32>
      %43 = arith.select %40, %41, %42 : vector<8x128xi1>, vector<8x128xf32>
      %44 = vector.broadcast %26 : f32 to vector<8x128xf32>
      %45 = arith.select %38, %44, %43 : vector<8x128xi1>, vector<8x128xf32>
      %46 = vector.broadcast %21 : f32 to vector<8x128xf32>
      %47 = arith.select %36, %46, %45 : vector<8x128xi1>, vector<8x128xf32>
      %48 = vector.broadcast %16 : f32 to vector<8x128xf32>
      %49 = arith.select %34, %48, %47 : vector<8x128xi1>, vector<8x128xf32>
      %c0_19 = arith.constant 0 : index
      %c0_20 = arith.constant 0 : index
      %50 = vector.load %arg5[%c0_19, %c0_20] : memref<8x128xf32, #tpu.memory_space<vmem>>, vector<8x128xf32>
      tpu.vector_store %arg5[%c0_19, %c0_20], %49 {strides = array<i32>} : memref<8x128xf32, #tpu.memory_space<vmem>>, vector<8x128xf32>,
    } else {
    }
    return
  }
  func.func @transform_0(%arg0: i32) -> (i32, i32) {
    %c0_i32 = arith.constant 0 : i32
    %0 = arith.minsi %arg0, %c0_i32 : i32
    %c0_i32_0 = arith.constant 0 : i32
    %c0_i32_1 = arith.constant 0 : i32
    return %0, %c0_i32_0 : i32, i32
  }
  func.func @transform_1(%arg0: i32) -> (i32, i32) {
    %c0_i32 = arith.constant 0 : i32
    %0 = arith.minsi %arg0, %c0_i32 : i32
    %c0_i32_0 = arith.constant 0 : i32
    %c0_i32_1 = arith.constant 0 : i32
    return %0, %c0_i32_0 : i32, i32
  }
  func.func @transform_2(%arg0: i32) -> (i32, i32) {
    %c0_i32 = arith.constant 0 : i32
    %0 = arith.minsi %arg0, %c0_i32 : i32
    %c0_i32_0 = arith.constant 0 : i32
    %c0_i32_1 = arith.constant 0 : i32
    return %0, %c0_i32_0 : i32, i32
  }
  func.func @transform_3(%arg0: i32) -> (i32, i32) {
    %c0_i32 = arith.constant 0 : i32
    %0 = arith.minsi %arg0, %c0_i32 : i32
    %c0_i32_0 = arith.constant 0 : i32
    %c0_i32_1 = arith.constant 0 : i32
    return %0, %c0_i32_0 : i32, i32
  }
  func.func @transform_4(%arg0: i32) -> (i32, i32) {
    %c0_i32 = arith.constant 0 : i32
    %c0_i32_0 = arith.constant 0 : i32
    %c0_i32_1 = arith.constant 0 : i32
    return %c0_i32, %c0_i32_0 : i32, i32
  }
}

</mosaic_0001>

<llo_original>
// kernel: tpu_custom_call.1
$region0: #{tpu_custom_call.1}
  #allocation0 [shape = 'u32[]', space=smem, size = 0x4, offset = 0x4, fixed_abs, tag = 'smem constant byte address 0x4 - core index']
  #allocation1 [shape = 'u32[144,128]{1,0:T(1,128)}', space=vmem, size = 0x12000, scoped, tag = 'internal scratch']
  #allocation2 [shape = 'f32[1,3]{1,0:T(1,128)}', space=vmem, size = 0x200, scoped, tag = 'scratch operand']
  #allocation3 [shape = 'f32[1,3]{1,0:T(1,128)}', space=vmem, size = 0x200, scoped, tag = 'scratch operand']
  #allocation4 [shape = 'f32[1,3]{1,0:T(1,128)}', space=vmem, size = 0x200, scoped, tag = 'scratch operand']
  #allocation5 [shape = 'f32[1,128]{1,0:T(1,128)}', space=vmem, size = 0x200, scoped, tag = 'scratch operand']
  %s0 = inlined_call_operand.vmem [shape: f32[304,10], index: 0, kind: input, shape index: {}]
  %s1 = inlined_call_operand.vmem [shape: f32[304,3], index: 1, kind: input, shape index: {}]
  %s2 = inlined_call_operand.vmem [shape: f32[40,128], index: 2, kind: input, shape index: {}]
  %s3 = inlined_call_operand.vmem [shape: f32[40,128], index: 3, kind: input, shape index: {}]
  %s4 = inlined_call_operand.hbm [shape: f32[8,128], index: 4, kind: output, shape index: {}]
  %s5 = sld [smem:[#allocation0]]
  $region38: #{tpu_custom_call.1} parent=0
    _
  %s7 = ssub.s32 1, %s5
  %s8 = scalar_select 0, %s7, %s5
  $region1: #{tpu_custom_call.1} parent=0
    #allocation6 [shape = 'u8[4096]{0}', space=vmem, size = 0x1000, scoped, tag = 'output window, operand 0, single buffered']
    #allocation7 [shape = 's32[1]{0}', space=sflag, size = 0x4, scoped, tag = 'scoped memory for tpu_custom_call.1']
    %9 = vsyncpa [#allocation7], 0
    // Predicated region
    $region2: #{tpu_custom_call.1} parent=1 // pred_check
      _
    $region3: #{tpu_custom_call.1} parent=1 // pred_check_branch
      %11 = sbr.rel (0) target = $region5
    $region4: #{tpu_custom_call.1} parent=1 // pred_region
      _
    $region5: #{tpu_custom_call.1} parent=1 // pred_fallthru
      _
    // Predicated region
    $region6: #{tpu_custom_call.1} parent=1 // pred_check
      _
    $region7: #{tpu_custom_call.1} parent=1 // pred_check_branch
      %13 = sbr.rel (0) target = $region9
    $region8: #{tpu_custom_call.1} parent=1 // pred_region
      _
    $region9: #{tpu_custom_call.1} parent=1 // pred_fallthru
      _
    // Predicated region
    $region10: #{tpu_custom_call.1} parent=1 // pred_check
      _
    $region11: #{tpu_custom_call.1} parent=1 // pred_check_branch
      %15 = sbr.rel (0) target = $region13
    $region12: #{tpu_custom_call.1} parent=1 // pred_region
      _
    $region13: #{tpu_custom_call.1} parent=1 // pred_fallthru
      _
    // Predicated region
    $region14: #{tpu_custom_call.1} parent=1 // pred_check
      _
    $region15: #{tpu_custom_call.1} parent=1 // pred_check_branch
      %17 = sbr.rel (0) target = $region17
    $region16: #{tpu_custom_call.1} parent=1 // pred_region
      _
    $region17: #{tpu_custom_call.1} parent=1 // pred_fallthru
      _
    %p18 = scmp.eq.s32.totalorder 0, 0
    // Predicated region
    $region18: #{tpu_custom_call.1} parent=1 // pred_check
      %p19 = pneg %p18
    $region19: #{tpu_custom_call.1} parent=1 // pred_check_branch
      %21 = sbr.rel (%p19) target = $region21
    $region20: #{tpu_custom_call.1} parent=1 // pred_region
      %vm22 = vcmask 16384
      %23 = vst.msk [vmem:[#allocation2] sm:$0x1] %vm22, 0.0
      %24 = vst.msk [vmem:[#allocation3] sm:$0x1] %vm22, 0.0
      %25 = vst.msk [vmem:[#allocation4] sm:$0x1] %vm22, 0.0
      %26 = vst [vmem:[#allocation5] sm:$0x1] 0.0
    $region21: #{tpu_custom_call.1} parent=1 // pred_fallthru
      _
    %p27 = scmp.lt.s32.totalorder 0, 1
    // Predicated region
    $region22: #{tpu_custom_call.1} parent=1 // pred_check
      %p28 = pneg %p27
    $region23: #{tpu_custom_call.1} parent=1 // pred_check_branch
      %30 = sbr.rel (%p28) target = $region25
    $region24: #{tpu_custom_call.1} parent=1 // pred_region
      %v31 = vld [vmem:[%s0] sm:$0xff]
      %v32 = vld [vmem:[%s0 + $0x8] sm:$0xff]
      %v33 = vld [vmem:[%s0 + $0x10] sm:$0xff]
      %v34 = vld [vmem:[%s0 + $0x18] sm:$0xff]
      %v35 = vld [vmem:[%s0 + $0x20] sm:$0xff]
      %v36 = vld [vmem:[%s0 + $0x28] sm:$0xff]
      %v37 = vld [vmem:[%s0 + $0x30] sm:$0xff]
      %v38 = vld [vmem:[%s0 + $0x38] sm:$0xff]
      %v39 = vld [vmem:[%s0 + $0x40] sm:$0xff]
      %v40 = vld [vmem:[%s0 + $0x48] sm:$0xff]
      %v41 = vld [vmem:[%s0 + $0x50] sm:$0xff]
      %v42 = vld [vmem:[%s0 + $0x58] sm:$0xff]
      %v43 = vld [vmem:[%s0 + $0x60] sm:$0xff]
      %v44 = vld [vmem:[%s0 + $0x68] sm:$0xff]
      %v45 = vld [vmem:[%s0 + $0x70] sm:$0xff]
      %v46 = vld [vmem:[%s0 + $0x78] sm:$0xff]
      %v47 = vld [vmem:[%s0 + $0x80] sm:$0xff]
      %v48 = vld [vmem:[%s0 + $0x88] sm:$0xff]
      %v49 = vld [vmem:[%s0 + $0x90] sm:$0xff]
      %v50 = vld [vmem:[%s0 + $0x98] sm:$0xff]
      %v51 = vld [vmem:[%s0 + $0xa0] sm:$0xff]
      %v52 = vld [vmem:[%s0 + $0xa8] sm:$0xff]
      %v53 = vld [vmem:[%s0 + $0xb0] sm:$0xff]
      %v54 = vld [vmem:[%s0 + $0xb8] sm:$0xff]
      %v55 = vld [vmem:[%s0 + $0xc0] sm:$0xff]
      %v56 = vld [vmem:[%s0 + $0xc8] sm:$0xff]
      %v57 = vld [vmem:[%s0 + $0xd0] sm:$0xff]
      %v58 = vld [vmem:[%s0 + $0xd8] sm:$0xff]
      %v59 = vld [vmem:[%s0 + $0xe0] sm:$0xff]
      %v60 = vld [vmem:[%s0 + $0xe8] sm:$0xff]
      %v61 = vld [vmem:[%s0 + $0xf0] sm:$0xff]
      %v62 = vld [vmem:[%s0 + $0xf8] sm:$0xff]
      %v63 = vld [vmem:[%s0 + $0x100] sm:$0xff]
      %v64 = vld [vmem:[%s0 + $0x108] sm:$0xff]
      %v65 = vld [vmem:[%s0 + $0x110] sm:$0xff]
      %v66 = vld [vmem:[%s0 + $0x118] sm:$0xff]
      %v67 = vld [vmem:[%s0 + $0x120] sm:$0xff]
      %v68 = vld [vmem:[%s0 + $0x128] sm:$0xff]
      %v69 = vld [vmem:[%s1] sm:$0xff]
      %v70 = vld [vmem:[%s1 + $0x8] sm:$0xff]
      %v71 = vld [vmem:[%s1 + $0x10] sm:$0xff]
      %v72 = vld [vmem:[%s1 + $0x18] sm:$0xff]
      %v73 = vld [vmem:[%s1 + $0x20] sm:$0xff]
      %v74 = vld [vmem:[%s1 + $0x28] sm:$0xff]
      %v75 = vld [vmem:[%s1 + $0x30] sm:$0xff]
      %v76 = vld [vmem:[%s1 + $0x38] sm:$0xff]
      %v77 = vld [vmem:[%s1 + $0x40] sm:$0xff]
      %v78 = vld [vmem:[%s1 + $0x48] sm:$0xff]
      %v79 = vld [vmem:[%s1 + $0x50] sm:$0xff]
      %v80 = vld [vmem:[%s1 + $0x58] sm:$0xff]
      %v81 = vld [vmem:[%s1 + $0x60] sm:$0xff]
      %v82 = vld [vmem:[%s1 + $0x68] sm:$0xff]
      %v83 = vld [vmem:[%s1 + $0x70] sm:$0xff]
      %v84 = vld [vmem:[%s1 + $0x78] sm:$0xff]
      %v85 = vld [vmem:[%s1 + $0x80] sm:$0xff]
      %v86 = vld [vmem:[%s1 + $0x88] sm:$0xff]
      %v87 = vld [vmem:[%s1 + $0x90] sm:$0xff]
      %v88 = vld [vmem:[%s1 + $0x98] sm:$0xff]
      %v89 = vld [vmem:[%s1 + $0xa0] sm:$0xff]
      %v90 = vld [vmem:[%s1 + $0xa8] sm:$0xff]
      %v91 = vld [vmem:[%s1 + $0xb0] sm:$0xff]
      %v92 = vld [vmem:[%s1 + $0xb8] sm:$0xff]
      %v93 = vld [vmem:[%s1 + $0xc0] sm:$0xff]
      %v94 = vld [vmem:[%s1 + $0xc8] sm:$0xff]
      %v95 = vld [vmem:[%s1 + $0xd0] sm:$0xff]
      %v96 = vld [vmem:[%s1 + $0xd8] sm:$0xff]
      %v97 = vld [vmem:[%s1 + $0xe0] sm:$0xff]
      %v98 = vld [vmem:[%s1 + $0xe8] sm:$0xff]
      %v99 = vld [vmem:[%s1 + $0xf0] sm:$0xff]
      %v100 = vld [vmem:[%s1 + $0xf8] sm:$0xff]
      %v101 = vld [vmem:[%s1 + $0x100] sm:$0xff]
      %v102 = vld [vmem:[%s1 + $0x108] sm:$0xff]
      %v103 = vld [vmem:[%s1 + $0x110] sm:$0xff]
      %v104 = vld [vmem:[%s1 + $0x118] sm:$0xff]
      %v105 = vld [vmem:[%s1 + $0x120] sm:$0xff]
      %v106 = vld [vmem:[%s1 + $0x128] sm:$0xff]
      %145 = vrot.lane.b32.xlu0 %v31, 122
      %v146 = vpop.permute.xlu0 %145
      %147 = vrot.lane.b32.xlu0 %v32, 122
      %v148 = vpop.permute.xlu0 %147
      %149 = vrot.lane.b32.xlu0 %v33, 122
      %v150 = vpop.permute.xlu0 %149
      %151 = vrot.lane.b32.xlu0 %v34, 122
      %v152 = vpop.permute.xlu0 %151
      %153 = vrot.lane.b32.xlu0 %v35, 122
      %v154 = vpop.permute.xlu0 %153
      %155 = vrot.lane.b32.xlu0 %v36, 122
      %v156 = vpop.permute.xlu0 %155
      %157 = vrot.lane.b32.xlu0 %v37, 122
      %v158 = vpop.permute.xlu0 %157
      %159 = vrot.lane.b32.xlu0 %v38, 122
      %v160 = vpop.permute.xlu0 %159
      %161 = vrot.lane.b32.xlu0 %v39, 122
      %v162 = vpop.permute.xlu0 %161
      %163 = vrot.lane.b32.xlu0 %v40, 122
      %v164 = vpop.permute.xlu0 %163
      %165 = vrot.lane.b32.xlu0 %v41, 122
      %v166 = vpop.permute.xlu0 %165
      %167 = vrot.lane.b32.xlu0 %v42, 122
      %v168 = vpop.permute.xlu0 %167
      %169 = vrot.lane.b32.xlu0 %v43, 122
      %v170 = vpop.permute.xlu0 %169
      %171 = vrot.lane.b32.xlu0 %v44, 122
      %v172 = vpop.permute.xlu0 %171
      %173 = vrot.lane.b32.xlu0 %v45, 122
      %v174 = vpop.permute.xlu0 %173
      %175 = vrot.lane.b32.xlu0 %v46, 122
      %v176 = vpop.permute.xlu0 %175
      %177 = vrot.lane.b32.xlu0 %v47, 122
      %v178 = vpop.permute.xlu0 %177
      %179 = vrot.lane.b32.xlu0 %v48, 122
      %v180 = vpop.permute.xlu0 %179
      %181 = vrot.lane.b32.xlu0 %v49, 122
      %v182 = vpop.permute.xlu0 %181
      %183 = vrot.lane.b32.xlu0 %v50, 122
      %v184 = vpop.permute.xlu0 %183
      %185 = vrot.lane.b32.xlu0 %v51, 122
      %v186 = vpop.permute.xlu0 %185
      %187 = vrot.lane.b32.xlu0 %v52, 122
      %v188 = vpop.permute.xlu0 %187
      %189 = vrot.lane.b32.xlu0 %v53, 122
      %v190 = vpop.permute.xlu0 %189
      %191 = vrot.lane.b32.xlu0 %v54, 122
      %v192 = vpop.permute.xlu0 %191
      %193 = vrot.lane.b32.xlu0 %v55, 122
      %v194 = vpop.permute.xlu0 %193
      %195 = vrot.lane.b32.xlu0 %v56, 122
      %v196 = vpop.permute.xlu0 %195
      %197 = vrot.lane.b32.xlu0 %v57, 122
      %v198 = vpop.permute.xlu0 %197
      %199 = vrot.lane.b32.xlu0 %v58, 122
      %v200 = vpop.permute.xlu0 %199
      %201 = vrot.lane.b32.xlu0 %v59, 122
      %v202 = vpop.permute.xlu0 %201
      %203 = vrot.lane.b32.xlu0 %v60, 122
      %v204 = vpop.permute.xlu0 %203
      %205 = vrot.lane.b32.xlu0 %v61, 122
      %v206 = vpop.permute.xlu0 %205
      %207 = vrot.lane.b32.xlu0 %v62, 122
      %v208 = vpop.permute.xlu0 %207
      %209 = vrot.lane.b32.xlu0 %v63, 122
      %v210 = vpop.permute.xlu0 %209
      %211 = vrot.lane.b32.xlu0 %v64, 122
      %v212 = vpop.permute.xlu0 %211
      %213 = vrot.lane.b32.xlu0 %v65, 122
      %v214 = vpop.permute.xlu0 %213
      %215 = vrot.lane.b32.xlu0 %v66, 122
      %v216 = vpop.permute.xlu0 %215
      %217 = vrot.lane.b32.xlu0 %v67, 122
      %v218 = vpop.permute.xlu0 %217
      %219 = vrot.lane.b32.xlu0 %v68, 122
      %v220 = vpop.permute.xlu0 %219
      %v259 = vsub.f32 %v69, %v146
      %v260 = vsub.f32 %v70, %v148
      %v261 = vsub.f32 %v71, %v150
      %v262 = vsub.f32 %v72, %v152
      %v263 = vsub.f32 %v73, %v154
      %v264 = vsub.f32 %v74, %v156
      %v265 = vsub.f32 %v75, %v158
      %v266 = vsub.f32 %v76, %v160
      %v267 = vsub.f32 %v77, %v162
      %v268 = vsub.f32 %v78, %v164
      %v269 = vsub.f32 %v79, %v166
      %v270 = vsub.f32 %v80, %v168
      %v271 = vsub.f32 %v81, %v170
      %v272 = vsub.f32 %v82, %v172
      %v273 = vsub.f32 %v83, %v174
      %v274 = vsub.f32 %v84, %v176
      %v275 = vsub.f32 %v85, %v178
      %v276 = vsub.f32 %v86, %v180
      %v277 = vsub.f32 %v87, %v182
      %v278 = vsub.f32 %v88, %v184
      %v279 = vsub.f32 %v89, %v186
      %v280 = vsub.f32 %v90, %v188
      %v281 = vsub.f32 %v91, %v190
      %v282 = vsub.f32 %v92, %v192
      %v283 = vsub.f32 %v93, %v194
      %v284 = vsub.f32 %v94, %v196
      %v285 = vsub.f32 %v95, %v198
      %v286 = vsub.f32 %v96, %v200
      %v287 = vsub.f32 %v97, %v202
      %v288 = vsub.f32 %v98, %v204
      %v289 = vsub.f32 %v99, %v206
      %v290 = vsub.f32 %v100, %v208
      %v291 = vsub.f32 %v101, %v210
      %v292 = vsub.f32 %v102, %v212
      %v293 = vsub.f32 %v103, %v214
      %v294 = vsub.f32 %v104, %v216
      %v295 = vsub.f32 %v105, %v218
      %v296 = vsub.f32 %v106, %v220
      %297 = vset.pattern.permute.xlu0 9
      %298 = vperm.xlu0 %297, %v31
      %v299 = vpop.permute.xlu0 %298
      %301 = vset.pattern.permute.xlu0 9
      %302 = vperm.xlu0 %301, %v32
      %v303 = vpop.permute.xlu0 %302
      %305 = vset.pattern.permute.xlu0 9
      %306 = vperm.xlu0 %305, %v33
      %v307 = vpop.permute.xlu0 %306
      %309 = vset.pattern.permute.xlu0 9
      %310 = vperm.xlu0 %309, %v34
      %v311 = vpop.permute.xlu0 %310
      %313 = vset.pattern.permute.xlu0 9
      %314 = vperm.xlu0 %313, %v35
      %v315 = vpop.permute.xlu0 %314
      %317 = vset.pattern.permute.xlu0 9
      %318 = vperm.xlu0 %317, %v36
      %v319 = vpop.permute.xlu0 %318
      %321 = vset.pattern.permute.xlu0 9
      %322 = vperm.xlu0 %321, %v37
      %v323 = vpop.permute.xlu0 %322
      %325 = vset.pattern.permute.xlu0 9
      %326 = vperm.xlu0 %325, %v38
      %v327 = vpop.permute.xlu0 %326
      %329 = vset.pattern.permute.xlu0 9
      %330 = vperm.xlu0 %329, %v39
      %v331 = vpop.permute.xlu0 %330
      %333 = vset.pattern.permute.xlu0 9
      %334 = vperm.xlu0 %333, %v40
      %v335 = vpop.permute.xlu0 %334
      %337 = vset.pattern.permute.xlu0 9
      %338 = vperm.xlu0 %337, %v41
      %v339 = vpop.permute.xlu0 %338
      %341 = vset.pattern.permute.xlu0 9
      %342 = vperm.xlu0 %341, %v42
      %v343 = vpop.permute.xlu0 %342
      %345 = vset.pattern.permute.xlu0 9
      %346 = vperm.xlu0 %345, %v43
      %v347 = vpop.permute.xlu0 %346
      %349 = vset.pattern.permute.xlu0 9
      %350 = vperm.xlu0 %349, %v44
      %v351 = vpop.permute.xlu0 %350
      %353 = vset.pattern.permute.xlu0 9
      %354 = vperm.xlu0 %353, %v45
      %v355 = vpop.permute.xlu0 %354
      %357 = vset.pattern.permute.xlu0 9
      %358 = vperm.xlu0 %357, %v46
      %v359 = vpop.permute.xlu0 %358
      %361 = vset.pattern.permute.xlu0 9
      %362 = vperm.xlu0 %361, %v47
      %v363 = vpop.permute.xlu0 %362
      %365 = vset.pattern.permute.xlu0 9
      %366 = vperm.xlu0 %365, %v48
      %v367 = vpop.permute.xlu0 %366
      %369 = vset.pattern.permute.xlu0 9
      %370 = vperm.xlu0 %369, %v49
      %v371 = vpop.permute.xlu0 %370
      %373 = vset.pattern.permute.xlu0 9
      %374 = vperm.xlu0 %373, %v50
      %v375 = vpop.permute.xlu0 %374
      %377 = vset.pattern.permute.xlu0 9
      %378 = vperm.xlu0 %377, %v51
      %v379 = vpop.permute.xlu0 %378
      %381 = vset.pattern.permute.xlu0 9
      %382 = vperm.xlu0 %381, %v52
      %v383 = vpop.permute.xlu0 %382
      %385 = vset.pattern.permute.xlu0 9
      %386 = vperm.xlu0 %385, %v53
      %v387 = vpop.permute.xlu0 %386
      %389 = vset.pattern.permute.xlu0 9
      %390 = vperm.xlu0 %389, %v54
      %v391 = vpop.permute.xlu0 %390
      %393 = vset.pattern.permute.xlu0 9
      %394 = vperm.xlu0 %393, %v55
      %v395 = vpop.permute.xlu0 %394
      %397 = vset.pattern.permute.xlu0 9
      %398 = vperm.xlu0 %397, %v56
      %v399 = vpop.permute.xlu0 %398
      %401 = vset.pattern.permute.xlu0 9
      %402 = vperm.xlu0 %401, %v57
      %v403 = vpop.permute.xlu0 %402
      %405 = vset.pattern.permute.xlu0 9
      %406 = vperm.xlu0 %405, %v58
      %v407 = vpop.permute.xlu0 %406
      %409 = vset.pattern.permute.xlu0 9
      %410 = vperm.xlu0 %409, %v59
      %v411 = vpop.permute.xlu0 %410
      %413 = vset.pattern.permute.xlu0 9
      %414 = vperm.xlu0 %413, %v60
      %v415 = vpop.permute.xlu0 %414
      %417 = vset.pattern.permute.xlu0 9
      %418 = vperm.xlu0 %417, %v61
      %v419 = vpop.permute.xlu0 %418
      %421 = vset.pattern.permute.xlu0 9
      %422 = vperm.xlu0 %421, %v62
      %v423 = vpop.permute.xlu0 %422
      %425 = vset.pattern.permute.xlu0 9
      %426 = vperm.xlu0 %425, %v63
      %v427 = vpop.permute.xlu0 %426
      %429 = vset.pattern.permute.xlu0 9
      %430 = vperm.xlu0 %429, %v64
      %v431 = vpop.permute.xlu0 %430
      %433 = vset.pattern.permute.xlu0 9
      %434 = vperm.xlu0 %433, %v65
      %v435 = vpop.permute.xlu0 %434
      %437 = vset.pattern.permute.xlu0 9
      %438 = vperm.xlu0 %437, %v66
      %v439 = vpop.permute.xlu0 %438
      %441 = vset.pattern.permute.xlu0 9
      %442 = vperm.xlu0 %441, %v67
      %v443 = vpop.permute.xlu0 %442
      %445 = vset.pattern.permute.xlu0 9
      %446 = vperm.xlu0 %445, %v68
      %v447 = vpop.permute.xlu0 %446
      %v449 = vmul.f32 %v259, %v299
      %v450 = vmul.f32 %v260, %v303
      %v451 = vmul.f32 %v261, %v307
      %v452 = vmul.f32 %v262, %v311
      %v453 = vmul.f32 %v263, %v315
      %v454 = vmul.f32 %v264, %v319
      %v455 = vmul.f32 %v265, %v323
      %v456 = vmul.f32 %v266, %v327
      %v457 = vmul.f32 %v267, %v331
      %v458 = vmul.f32 %v268, %v335
      %v459 = vmul.f32 %v269, %v339
      %v460 = vmul.f32 %v270, %v343
      %v461 = vmul.f32 %v271, %v347
      %v462 = vmul.f32 %v272, %v351
      %v463 = vmul.f32 %v273, %v355
      %v464 = vmul.f32 %v274, %v359
      %v465 = vmul.f32 %v275, %v363
      %v466 = vmul.f32 %v276, %v367
      %v467 = vmul.f32 %v277, %v371
      %v468 = vmul.f32 %v278, %v375
      %v469 = vmul.f32 %v279, %v379
      %v470 = vmul.f32 %v280, %v383
      %v471 = vmul.f32 %v281, %v387
      %v472 = vmul.f32 %v282, %v391
      %v473 = vmul.f32 %v283, %v395
      %v474 = vmul.f32 %v284, %v399
      %v475 = vmul.f32 %v285, %v403
      %v476 = vmul.f32 %v286, %v407
      %v477 = vmul.f32 %v287, %v411
      %v478 = vmul.f32 %v288, %v415
      %v479 = vmul.f32 %v289, %v419
      %v480 = vmul.f32 %v290, %v423
      %v481 = vmul.f32 %v291, %v427
      %v482 = vmul.f32 %v292, %v431
      %v483 = vmul.f32 %v293, %v435
      %v484 = vmul.f32 %v294, %v439
      %v485 = vmul.f32 %v295, %v443
      %v486 = vmul.f32 %v296, %v447
      %v487 = vand.u32 2147483647, %v449
      %v488 = vand.u32 2147483647, %v450
      %v489 = vand.u32 2147483647, %v451
      %v490 = vand.u32 2147483647, %v452
      %v491 = vand.u32 2147483647, %v453
      %v492 = vand.u32 2147483647, %v454
      %v493 = vand.u32 2147483647, %v455
      %v494 = vand.u32 2147483647, %v456
      %v495 = vand.u32 2147483647, %v457
      %v496 = vand.u32 2147483647, %v458
      %v497 = vand.u32 2147483647, %v459
      %v498 = vand.u32 2147483647, %v460
      %v499 = vand.u32 2147483647, %v461
      %v500 = vand.u32 2147483647, %v462
      %v501 = vand.u32 2147483647, %v463
      %v502 = vand.u32 2147483647, %v464
      %v503 = vand.u32 2147483647, %v465
      %v504 = vand.u32 2147483647, %v466
      %v505 = vand.u32 2147483647, %v467
      %v506 = vand.u32 2147483647, %v468
      %v507 = vand.u32 2147483647, %v469
      %v508 = vand.u32 2147483647, %v470
      %v509 = vand.u32 2147483647, %v471
      %v510 = vand.u32 2147483647, %v472
      %v511 = vand.u32 2147483647, %v473
      %v512 = vand.u32 2147483647, %v474
      %v513 = vand.u32 2147483647, %v475
      %v514 = vand.u32 2147483647, %v476
      %v515 = vand.u32 2147483647, %v477
      %v516 = vand.u32 2147483647, %v478
      %v517 = vand.u32 2147483647, %v479
      %v518 = vand.u32 2147483647, %v480
      %v519 = vand.u32 2147483647, %v481
      %v520 = vand.u32 2147483647, %v482
      %v521 = vand.u32 2147483647, %v483
      %v522 = vand.u32 2147483647, %v484
      %v523 = vand.u32 2147483647, %v485
      %v524 = vand.u32 2147483647, %v486
      %v525 = vmul.f32 %v449, %v449
      %v526 = vmul.f32 %v450, %v450
      %v527 = vmul.f32 %v451, %v451
      %v528 = vmul.f32 %v452, %v452
      %v529 = vmul.f32 %v453, %v453
      %v530 = vmul.f32 %v454, %v454
      %v531 = vmul.f32 %v455, %v455
      %v532 = vmul.f32 %v456, %v456
      %v533 = vmul.f32 %v457, %v457
      %v534 = vmul.f32 %v458, %v458
      %v535 = vmul.f32 %v459, %v459
      %v536 = vmul.f32 %v460, %v460
      %v537 = vmul.f32 %v461, %v461
      %v538 = vmul.f32 %v462, %v462
      %v539 = vmul.f32 %v463, %v463
      %v540 = vmul.f32 %v464, %v464
      %v541 = vmul.f32 %v465, %v465
      %v542 = vmul.f32 %v466, %v466
      %v543 = vmul.f32 %v467, %v467
      %v544 = vmul.f32 %v468, %v468
      %v545 = vmul.f32 %v469, %v469
      %v546 = vmul.f32 %v470, %v470
      %v547 = vmul.f32 %v471, %v471
      %v548 = vmul.f32 %v472, %v472
      %v549 = vmul.f32 %v473, %v473
      %v550 = vmul.f32 %v474, %v474
      %v551 = vmul.f32 %v475, %v475
      %v552 = vmul.f32 %v476, %v476
      %v553 = vmul.f32 %v477, %v477
      %v554 = vmul.f32 %v478, %v478
      %v555 = vmul.f32 %v479, %v479
      %v556 = vmul.f32 %v480, %v480
      %v557 = vmul.f32 %v481, %v481
      %v558 = vmul.f32 %v482, %v482
      %v559 = vmul.f32 %v483, %v483
      %v560 = vmul.f32 %v484, %v484
      %v561 = vmul.f32 %v485, %v485
      %v562 = vmul.f32 %v486, %v486
      %vm563 = vcmp.lt.f32.partialorder %v487, 0.1
      %vm564 = vcmp.lt.f32.partialorder %v488, 0.1
      %vm565 = vcmp.lt.f32.partialorder %v489, 0.1
      %vm566 = vcmp.lt.f32.partialorder %v490, 0.1
      %vm567 = vcmp.lt.f32.partialorder %v491, 0.1
      %vm568 = vcmp.lt.f32.partialorder %v492, 0.1
      %vm569 = vcmp.lt.f32.partialorder %v493, 0.1
      %vm570 = vcmp.lt.f32.partialorder %v494, 0.1
      %vm571 = vcmp.lt.f32.partialorder %v495, 0.1
      %vm572 = vcmp.lt.f32.partialorder %v496, 0.1
      %vm573 = vcmp.lt.f32.partialorder %v497, 0.1
      %vm574 = vcmp.lt.f32.partialorder %v498, 0.1
      %vm575 = vcmp.lt.f32.partialorder %v499, 0.1
      %vm576 = vcmp.lt.f32.partialorder %v500, 0.1
      %vm577 = vcmp.lt.f32.partialorder %v501, 0.1
      %vm578 = vcmp.lt.f32.partialorder %v502, 0.1
      %vm579 = vcmp.lt.f32.partialorder %v503, 0.1
      %vm580 = vcmp.lt.f32.partialorder %v504, 0.1
      %vm581 = vcmp.lt.f32.partialorder %v505, 0.1
      %vm582 = vcmp.lt.f32.partialorder %v506, 0.1
      %vm583 = vcmp.lt.f32.partialorder %v507, 0.1
      %vm584 = vcmp.lt.f32.partialorder %v508, 0.1
      %vm585 = vcmp.lt.f32.partialorder %v509, 0.1
      %vm586 = vcmp.lt.f32.partialorder %v510, 0.1
      %vm587 = vcmp.lt.f32.partialorder %v511, 0.1
      %vm588 = vcmp.lt.f32.partialorder %v512, 0.1
      %vm589 = vcmp.lt.f32.partialorder %v513, 0.1
      %vm590 = vcmp.lt.f32.partialorder %v514, 0.1
      %vm591 = vcmp.lt.f32.partialorder %v515, 0.1
      %vm592 = vcmp.lt.f32.partialorder %v516, 0.1
      %vm593 = vcmp.lt.f32.partialorder %v517, 0.1
      %vm594 = vcmp.lt.f32.partialorder %v518, 0.1
      %vm595 = vcmp.lt.f32.partialorder %v519, 0.1
      %vm596 = vcmp.lt.f32.partialorder %v520, 0.1
      %vm597 = vcmp.lt.f32.partialorder %v521, 0.1
      %vm598 = vcmp.lt.f32.partialorder %v522, 0.1
      %vm599 = vcmp.lt.f32.partialorder %v523, 0.1
      %vm600 = vcmp.lt.f32.partialorder %v524, 0.1
      %v601 = vmul.f32 %v525, 5.0
      %v602 = vmul.f32 %v526, 5.0
      %v603 = vmul.f32 %v527, 5.0
      %v604 = vmul.f32 %v528, 5.0
      %v605 = vmul.f32 %v529, 5.0
      %v606 = vmul.f32 %v530, 5.0
      %v607 = vmul.f32 %v531, 5.0
      %v608 = vmul.f32 %v532, 5.0
      %v609 = vmul.f32 %v533, 5.0
      %v610 = vmul.f32 %v534, 5.0
      %v611 = vmul.f32 %v535, 5.0
      %v612 = vmul.f32 %v536, 5.0
      %v613 = vmul.f32 %v537, 5.0
      %v614 = vmul.f32 %v538, 5.0
      %v615 = vmul.f32 %v539, 5.0
      %v616 = vmul.f32 %v540, 5.0
      %v617 = vmul.f32 %v541, 5.0
      %v618 = vmul.f32 %v542, 5.0
      %v619 = vmul.f32 %v543, 5.0
      %v620 = vmul.f32 %v544, 5.0
      %v621 = vmul.f32 %v545, 5.0
      %v622 = vmul.f32 %v546, 5.0
      %v623 = vmul.f32 %v547, 5.0
      %v624 = vmul.f32 %v548, 5.0
      %v625 = vmul.f32 %v549, 5.0
      %v626 = vmul.f32 %v550, 5.0
      %v627 = vmul.f32 %v551, 5.0
      %v628 = vmul.f32 %v552, 5.0
      %v629 = vmul.f32 %v553, 5.0
      %v630 = vmul.f32 %v554, 5.0
      %v631 = vmul.f32 %v555, 5.0
      %v632 = vmul.f32 %v556, 5.0
      %v633 = vmul.f32 %v557, 5.0
      %v634 = vmul.f32 %v558, 5.0
      %v635 = vmul.f32 %v559, 5.0
      %v636 = vmul.f32 %v560, 5.0
      %v637 = vmul.f32 %v561, 5.0
      %v638 = vmul.f32 %v562, 5.0
      %v639 = vsub.f32 %v487, 0.05
      %v640 = vsub.f32 %v488, 0.05
      %v641 = vsub.f32 %v489, 0.05
      %v642 = vsub.f32 %v490, 0.05
      %v643 = vsub.f32 %v491, 0.05
      %v644 = vsub.f32 %v492, 0.05
      %v645 = vsub.f32 %v493, 0.05
      %v646 = vsub.f32 %v494, 0.05
      %v647 = vsub.f32 %v495, 0.05
      %v648 = vsub.f32 %v496, 0.05
      %v649 = vsub.f32 %v497, 0.05
      %v650 = vsub.f32 %v498, 0.05
      %v651 = vsub.f32 %v499, 0.05
      %v652 = vsub.f32 %v500, 0.05
      %v653 = vsub.f32 %v501, 0.05
      %v654 = vsub.f32 %v502, 0.05
      %v655 = vsub.f32 %v503, 0.05
      %v656 = vsub.f32 %v504, 0.05
      %v657 = vsub.f32 %v505, 0.05
      %v658 = vsub.f32 %v506, 0.05
      %v659 = vsub.f32 %v507, 0.05
      %v660 = vsub.f32 %v508, 0.05
      %v661 = vsub.f32 %v509, 0.05
      %v662 = vsub.f32 %v510, 0.05
      %v663 = vsub.f32 %v511, 0.05
      %v664 = vsub.f32 %v512, 0.05
      %v665 = vsub.f32 %v513, 0.05
      %v666 = vsub.f32 %v514, 0.05
      %v667 = vsub.f32 %v515, 0.05
      %v668 = vsub.f32 %v516, 0.05
      %v669 = vsub.f32 %v517, 0.05
      %v670 = vsub.f32 %v518, 0.05
      %v671 = vsub.f32 %v519, 0.05
      %v672 = vsub.f32 %v520, 0.05
      %v673 = vsub.f32 %v521, 0.05
      %v674 = vsub.f32 %v522, 0.05
      %v675 = vsub.f32 %v523, 0.05
      %v676 = vsub.f32 %v524, 0.05
      %v677 = vsel %vm563, %v601, %v639
      %v678 = vsel %vm564, %v602, %v640
      %v679 = vsel %vm565, %v603, %v641
      %v680 = vsel %vm566, %v604, %v642
      %v681 = vsel %vm567, %v605, %v643
      %v682 = vsel %vm568, %v606, %v644
      %v683 = vsel %vm569, %v607, %v645
      %v684 = vsel %vm570, %v608, %v646
      %v685 = vsel %vm571, %v609, %v647
      %v686 = vsel %vm572, %v610, %v648
      %v687 = vsel %vm573, %v611, %v649
      %v688 = vsel %vm574, %v612, %v650
      %v689 = vsel %vm575, %v613, %v651
      %v690 = vsel %vm576, %v614, %v652
      %v691 = vsel %vm577, %v615, %v653
      %v692 = vsel %vm578, %v616, %v654
      %v693 = vsel %vm579, %v617, %v655
      %v694 = vsel %vm580, %v618, %v656
      %v695 = vsel %vm581, %v619, %v657
      %v696 = vsel %vm582, %v620, %v658
      %v697 = vsel %vm583, %v621, %v659
      %v698 = vsel %vm584, %v622, %v660
      %v699 = vsel %vm585, %v623, %v661
      %v700 = vsel %vm586, %v624, %v662
      %v701 = vsel %vm587, %v625, %v663
      %v702 = vsel %vm588, %v626, %v664
      %v703 = vsel %vm589, %v627, %v665
      %v704 = vsel %vm590, %v628, %v666
      %v705 = vsel %vm591, %v629, %v667
      %v706 = vsel %vm592, %v630, %v668
      %v707 = vsel %vm593, %v631, %v669
      %v708 = vsel %vm594, %v632, %v670
      %v709 = vsel %vm595, %v633, %v671
      %v710 = vsel %vm596, %v634, %v672
      %v711 = vsel %vm597, %v635, %v673
      %v712 = vsel %vm598, %v636, %v674
      %v713 = vsel %vm599, %v637, %v675
      %v714 = vsel %vm600, %v638, %v676
      %v715 = vld [vmem:[#allocation2] sm:$0x1]
      %vm716 = vcmask 23552
      %v717 = vsel %vm716, %v487, 0.0
      %v718 = vsel %vm716, %v488, 0.0
      %v719 = vadd.f32 %v717, %v718
      %v720 = vsel %vm716, %v489, 0.0
      %v721 = vadd.f32 %v719, %v720
      %v722 = vsel %vm716, %v490, 0.0
      %v723 = vadd.f32 %v721, %v722
      %v724 = vsel %vm716, %v491, 0.0
      %v725 = vadd.f32 %v723, %v724
      %v726 = vsel %vm716, %v492, 0.0
      %v727 = vadd.f32 %v725, %v726
      %v728 = vsel %vm716, %v493, 0.0
      %v729 = vadd.f32 %v727, %v728
      %v730 = vsel %vm716, %v494, 0.0
      %v731 = vadd.f32 %v729, %v730
      %v732 = vsel %vm716, %v495, 0.0
      %v733 = vadd.f32 %v731, %v732
      %v734 = vsel %vm716, %v496, 0.0
      %v735 = vadd.f32 %v733, %v734
      %v736 = vsel %vm716, %v497, 0.0
      %v737 = vadd.f32 %v735, %v736
      %v738 = vsel %vm716, %v498, 0.0
      %v739 = vadd.f32 %v737, %v738
      %v740 = vsel %vm716, %v499, 0.0
      %v741 = vadd.f32 %v739, %v740
      %v742 = vsel %vm716, %v500, 0.0
      %v743 = vadd.f32 %v741, %v742
      %v744 = vsel %vm716, %v501, 0.0
      %v745 = vadd.f32 %v743, %v744
      %v746 = vsel %vm716, %v502, 0.0
      %v747 = vadd.f32 %v745, %v746
      %v748 = vsel %vm716, %v503, 0.0
      %v749 = vadd.f32 %v747, %v748
      %v750 = vsel %vm716, %v504, 0.0
      %v751 = vadd.f32 %v749, %v750
      %v752 = vsel %vm716, %v505, 0.0
      %v753 = vadd.f32 %v751, %v752
      %v754 = vsel %vm716, %v506, 0.0
      %v755 = vadd.f32 %v753, %v754
      %v756 = vsel %vm716, %v507, 0.0
      %v757 = vadd.f32 %v755, %v756
      %v758 = vsel %vm716, %v508, 0.0
      %v759 = vadd.f32 %v757, %v758
      %v760 = vsel %vm716, %v509, 0.0
      %v761 = vadd.f32 %v759, %v760
      %v762 = vsel %vm716, %v510, 0.0
      %v763 = vadd.f32 %v761, %v762
      %v764 = vsel %vm716, %v511, 0.0
      %v765 = vadd.f32 %v763, %v764
      %v766 = vsel %vm716, %v512, 0.0
      %v767 = vadd.f32 %v765, %v766
      %v768 = vsel %vm716, %v513, 0.0
      %v769 = vadd.f32 %v767, %v768
      %v770 = vsel %vm716, %v514, 0.0
      %v771 = vadd.f32 %v769, %v770
      %v772 = vsel %vm716, %v515, 0.0
      %v773 = vadd.f32 %v771, %v772
      %v774 = vsel %vm716, %v516, 0.0
      %v775 = vadd.f32 %v773, %v774
      %v776 = vsel %vm716, %v517, 0.0
      %v777 = vadd.f32 %v775, %v776
      %v778 = vsel %vm716, %v518, 0.0
      %v779 = vadd.f32 %v777, %v778
      %v780 = vsel %vm716, %v519, 0.0
      %v781 = vadd.f32 %v779, %v780
      %v782 = vsel %vm716, %v520, 0.0
      %v783 = vadd.f32 %v781, %v782
      %v784 = vsel %vm716, %v521, 0.0
      %v785 = vadd.f32 %v783, %v784
      %v786 = vsel %vm716, %v522, 0.0
      %v787 = vadd.f32 %v785, %v786
      %v788 = vsel %vm716, %v523, 0.0
      %v789 = vadd.f32 %v787, %v788
      %v790 = vsel %vm716, %v524, 0.0
      %v791 = vadd.f32 %v789, %v790
      %v792 = vrot.slane %v791, 4
      %v793 = vadd.f32 %v791, %v792
      %v794 = vrot.slane %v793, 2
      %v795 = vadd.f32 %v793, %v794
      %v796 = vrot.slane %v795, 1
      %v797 = vadd.f32 %v795, %v796
      %v798 = vadd.f32 %v715, %v797
      %vm799 = vcmask 16384
      %800 = vst.msk [vmem:[#allocation2] sm:$0x1] %vm799, %v798
      %v801 = vld [vmem:[#allocation3] sm:$0x1]
      %v802 = vsel %vm716, %v525, 0.0
      %v803 = vsel %vm716, %v526, 0.0
      %v804 = vadd.f32 %v802, %v803
      %v805 = vsel %vm716, %v527, 0.0
      %v806 = vadd.f32 %v804, %v805
      %v807 = vsel %vm716, %v528, 0.0
      %v808 = vadd.f32 %v806, %v807
      %v809 = vsel %vm716, %v529, 0.0
      %v810 = vadd.f32 %v808, %v809
      %v811 = vsel %vm716, %v530, 0.0
      %v812 = vadd.f32 %v810, %v811
      %v813 = vsel %vm716, %v531, 0.0
      %v814 = vadd.f32 %v812, %v813
      %v815 = vsel %vm716, %v532, 0.0
      %v816 = vadd.f32 %v814, %v815
      %v817 = vsel %vm716, %v533, 0.0
      %v818 = vadd.f32 %v816, %v817
      %v819 = vsel %vm716, %v534, 0.0
      %v820 = vadd.f32 %v818, %v819
      %v821 = vsel %vm716, %v535, 0.0
      %v822 = vadd.f32 %v820, %v821
      %v823 = vsel %vm716, %v536, 0.0
      %v824 = vadd.f32 %v822, %v823
      %v825 = vsel %vm716, %v537, 0.0
      %v826 = vadd.f32 %v824, %v825
      %v827 = vsel %vm716, %v538, 0.0
      %v828 = vadd.f32 %v826, %v827
      %v829 = vsel %vm716, %v539, 0.0
      %v830 = vadd.f32 %v828, %v829
      %v831 = vsel %vm716, %v540, 0.0
      %v832 = vadd.f32 %v830, %v831
      %v833 = vsel %vm716, %v541, 0.0
      %v834 = vadd.f32 %v832, %v833
      %v835 = vsel %vm716, %v542, 0.0
      %v836 = vadd.f32 %v834, %v835
      %v837 = vsel %vm716, %v543, 0.0
      %v838 = vadd.f32 %v836, %v837
      %v839 = vsel %vm716, %v544, 0.0
      %v840 = vadd.f32 %v838, %v839
      %v841 = vsel %vm716, %v545, 0.0
      %v842 = vadd.f32 %v840, %v841
      %v843 = vsel %vm716, %v546, 0.0
      %v844 = vadd.f32 %v842, %v843
      %v845 = vsel %vm716, %v547, 0.0
      %v846 = vadd.f32 %v844, %v845
      %v847 = vsel %vm716, %v548, 0.0
      %v848 = vadd.f32 %v846, %v847
      %v849 = vsel %vm716, %v549, 0.0
      %v850 = vadd.f32 %v848, %v849
      %v851 = vsel %vm716, %v550, 0.0
      %v852 = vadd.f32 %v850, %v851
      %v853 = vsel %vm716, %v551, 0.0
      %v854 = vadd.f32 %v852, %v853
      %v855 = vsel %vm716, %v552, 0.0
      %v856 = vadd.f32 %v854, %v855
      %v857 = vsel %vm716, %v553, 0.0
      %v858 = vadd.f32 %v856, %v857
      %v859 = vsel %vm716, %v554, 0.0
      %v860 = vadd.f32 %v858, %v859
      %v861 = vsel %vm716, %v555, 0.0
      %v862 = vadd.f32 %v860, %v861
      %v863 = vsel %vm716, %v556, 0.0
      %v864 = vadd.f32 %v862, %v863
      %v865 = vsel %vm716, %v557, 0.0
      %v866 = vadd.f32 %v864, %v865
      %v867 = vsel %vm716, %v558, 0.0
      %v868 = vadd.f32 %v866, %v867
      %v869 = vsel %vm716, %v559, 0.0
      %v870 = vadd.f32 %v868, %v869
      %v871 = vsel %vm716, %v560, 0.0
      %v872 = vadd.f32 %v870, %v871
      %v873 = vsel %vm716, %v561, 0.0
      %v874 = vadd.f32 %v872, %v873
      %v875 = vsel %vm716, %v562, 0.0
      %v876 = vadd.f32 %v874, %v875
      %v877 = vrot.slane %v876, 4
      %v878 = vadd.f32 %v876, %v877
      %v879 = vrot.slane %v878, 2
      %v880 = vadd.f32 %v878, %v879
      %v881 = vrot.slane %v880, 1
      %v882 = vadd.f32 %v880, %v881
      %v883 = vadd.f32 %v801, %v882
      %884 = vst.msk [vmem:[#allocation3] sm:$0x1] %vm799, %v883
      %v885 = vld [vmem:[#allocation4] sm:$0x1]
      %v886 = vsel %vm716, %v677, 0.0
      %v887 = vsel %vm716, %v678, 0.0
      %v888 = vadd.f32 %v886, %v887
      %v889 = vsel %vm716, %v679, 0.0
      %v890 = vadd.f32 %v888, %v889
      %v891 = vsel %vm716, %v680, 0.0
      %v892 = vadd.f32 %v890, %v891
      %v893 = vsel %vm716, %v681, 0.0
      %v894 = vadd.f32 %v892, %v893
      %v895 = vsel %vm716, %v682, 0.0
      %v896 = vadd.f32 %v894, %v895
      %v897 = vsel %vm716, %v683, 0.0
      %v898 = vadd.f32 %v896, %v897
      %v899 = vsel %vm716, %v684, 0.0
      %v900 = vadd.f32 %v898, %v899
      %v901 = vsel %vm716, %v685, 0.0
      %v902 = vadd.f32 %v900, %v901
      %v903 = vsel %vm716, %v686, 0.0
      %v904 = vadd.f32 %v902, %v903
      %v905 = vsel %vm716, %v687, 0.0
      %v906 = vadd.f32 %v904, %v905
      %v907 = vsel %vm716, %v688, 0.0
      %v908 = vadd.f32 %v906, %v907
      %v909 = vsel %vm716, %v689, 0.0
      %v910 = vadd.f32 %v908, %v909
      %v911 = vsel %vm716, %v690, 0.0
      %v912 = vadd.f32 %v910, %v911
      %v913 = vsel %vm716, %v691, 0.0
      %v914 = vadd.f32 %v912, %v913
      %v915 = vsel %vm716, %v692, 0.0
      %v916 = vadd.f32 %v914, %v915
      %v917 = vsel %vm716, %v693, 0.0
      %v918 = vadd.f32 %v916, %v917
      %v919 = vsel %vm716, %v694, 0.0
      %v920 = vadd.f32 %v918, %v919
      %v921 = vsel %vm716, %v695, 0.0
      %v922 = vadd.f32 %v920, %v921
      %v923 = vsel %vm716, %v696, 0.0
      %v924 = vadd.f32 %v922, %v923
      %v925 = vsel %vm716, %v697, 0.0
      %v926 = vadd.f32 %v924, %v925
      %v927 = vsel %vm716, %v698, 0.0
      %v928 = vadd.f32 %v926, %v927
      %v929 = vsel %vm716, %v699, 0.0
      %v930 = vadd.f32 %v928, %v929
      %v931 = vsel %vm716, %v700, 0.0
      %v932 = vadd.f32 %v930, %v931
      %v933 = vsel %vm716, %v701, 0.0
      %v934 = vadd.f32 %v932, %v933
      %v935 = vsel %vm716, %v702, 0.0
      %v936 = vadd.f32 %v934, %v935
      %v937 = vsel %vm716, %v703, 0.0
      %v938 = vadd.f32 %v936, %v937
      %v939 = vsel %vm716, %v704, 0.0
      %v940 = vadd.f32 %v938, %v939
      %v941 = vsel %vm716, %v705, 0.0
      %v942 = vadd.f32 %v940, %v941
      %v943 = vsel %vm716, %v706, 0.0
      %v944 = vadd.f32 %v942, %v943
      %v945 = vsel %vm716, %v707, 0.0
      %v946 = vadd.f32 %v944, %v945
      %v947 = vsel %vm716, %v708, 0.0
      %v948 = vadd.f32 %v946, %v947
      %v949 = vsel %vm716, %v709, 0.0
      %v950 = vadd.f32 %v948, %v949
      %v951 = vsel %vm716, %v710, 0.0
      %v952 = vadd.f32 %v950, %v951
      %v953 = vsel %vm716, %v711, 0.0
      %v954 = vadd.f32 %v952, %v953
      %v955 = vsel %vm716, %v712, 0.0
      %v956 = vadd.f32 %v954, %v955
      %v957 = vsel %vm716, %v713, 0.0
      %v958 = vadd.f32 %v956, %v957
      %v959 = vsel %vm716, %v714, 0.0
      %v960 = vadd.f32 %v958, %v959
      %v961 = vrot.slane %v960, 4
      %v962 = vadd.f32 %v960, %v961
      %v963 = vrot.slane %v962, 2
      %v964 = vadd.f32 %v962, %v963
      %v965 = vrot.slane %v964, 1
      %v966 = vadd.f32 %v964, %v965
      %v967 = vadd.f32 %v885, %v966
      %968 = vst.msk [vmem:[#allocation4] sm:$0x1] %vm799, %v967
      %v969 = vld [vmem:[%s2] sm:$0xff]
      %v970 = vld [vmem:[%s2 + $0x8] sm:$0xff]
      %v971 = vld [vmem:[%s2 + $0x10] sm:$0xff]
      %v972 = vld [vmem:[%s2 + $0x18] sm:$0xff]
      %v973 = vld [vmem:[%s2 + $0x20] sm:$0xff]
      %v974 = vld [vmem:[%s3] sm:$0xff]
      %v975 = vld [vmem:[%s3 + $0x8] sm:$0xff]
      %v976 = vld [vmem:[%s3 + $0x10] sm:$0xff]
      %v977 = vld [vmem:[%s3 + $0x18] sm:$0xff]
      %v978 = vld [vmem:[%s3 + $0x20] sm:$0xff]
      %v979 = vsub.f32 %v969, %v974
      %v980 = vsub.f32 %v970, %v975
      %v981 = vsub.f32 %v971, %v976
      %v982 = vsub.f32 %v972, %v977
      %v983 = vsub.f32 %v973, %v978
      %v984 = vld [vmem:[#allocation5] sm:$0x1]
      %v985 = vand.u32 2147483647, %v979
      %v986 = vand.u32 2147483647, %v980
      %v987 = vand.u32 2147483647, %v981
      %v988 = vand.u32 2147483647, %v982
      %v989 = vand.u32 2147483647, %v983
      %v990 = vadd.f32 %v985, %v986
      %v991 = vadd.f32 %v990, %v987
      %v992 = vadd.f32 %v991, %v988
      %v993 = vadd.f32 %v992, %v989
      %v994 = vrot.slane %v993, 4
      %v995 = vadd.f32 %v993, %v994
      %v996 = vrot.slane %v995, 2
      %v997 = vadd.f32 %v995, %v996
      %v998 = vrot.slane %v997, 1
      %v999 = vadd.f32 %v997, %v998
      %v1000 = vadd.f32 %v984, %v999
      %1001 = vst [vmem:[#allocation5] sm:$0x1] %v1000
    $region25: #{tpu_custom_call.1} parent=1 // pred_fallthru
      _
    // Predicated region
    $region26: #{tpu_custom_call.1} parent=1 // pred_check
      %p1002 = pneg %p18
    $region27: #{tpu_custom_call.1} parent=1 // pred_check_branch
      %1004 = sbr.rel (%p1002) target = $region29
    $region28: #{tpu_custom_call.1} parent=1 // pred_region
      %v1005 = vld [vmem:[#allocation2] sm:$0x1]
      %vm1006 = vcmask 16384
      %v1007 = vsel %vm1006, %v1005, 0.0
      %1008 = vadd.xlane.f32.xlu0 %v1007
      %v1009 = vpop.xlane.xlu0 %1008
      %v1010 = vrot.slane %v1009, 4
      %v1011 = vadd.f32 %v1009, %v1010
      %v1012 = vrot.slane %v1011, 2
      %v1013 = vadd.f32 %v1011, %v1012
      %v1014 = vrot.slane %v1013, 1
      %v1015 = vadd.f32 %v1013, %v1014
      %s1016 = vtos %v1015
      %v1017 = vld [vmem:[#allocation3] sm:$0x1]
      %v1018 = vsel %vm1006, %v1017, 0.0
      %1019 = vadd.xlane.f32.xlu0 %v1018
      %v1020 = vpop.xlane.xlu0 %1019
      %v1021 = vrot.slane %v1020, 4
      %v1022 = vadd.f32 %v1020, %v1021
      %v1023 = vrot.slane %v1022, 2
      %v1024 = vadd.f32 %v1022, %v1023
      %v1025 = vrot.slane %v1024, 1
      %v1026 = vadd.f32 %v1024, %v1025
      %s1027 = vtos %v1026
      %v1028 = vld [vmem:[#allocation4] sm:$0x1]
      %v1029 = vsel %vm1006, %v1028, 0.0
      %1030 = vadd.xlane.f32.xlu0 %v1029
      %v1031 = vpop.xlane.xlu0 %1030
      %v1032 = vrot.slane %v1031, 4
      %v1033 = vadd.f32 %v1031, %v1032
      %v1034 = vrot.slane %v1033, 2
      %v1035 = vadd.f32 %v1033, %v1034
      %v1036 = vrot.slane %v1035, 1
      %v1037 = vadd.f32 %v1035, %v1036
      %s1038 = vtos %v1037
      %v1039 = vld [vmem:[#allocation5] sm:$0x1]
      %vm1040 = vcmask 1040384
      %v1041 = vsel %vm1040, %v1039, 0.0
      %1042 = vadd.xlane.f32.xlu0 %v1041
      %v1043 = vpop.xlane.xlu0 %1042
      %v1044 = vrot.slane %v1043, 4
      %v1045 = vadd.f32 %v1043, %v1044
      %v1046 = vrot.slane %v1045, 2
      %v1047 = vadd.f32 %v1045, %v1046
      %v1048 = vrot.slane %v1047, 1
      %v1049 = vadd.f32 %v1047, %v1048
      %s1050 = vtos %v1049
      %v1051 = vlaneseq
      %v1052 = vand.u32 %v1051, 127
      %vm1053 = vcmp.eq.s32.totalorder %v1052, 0
      %vm1054 = vcmp.eq.s32.totalorder %v1052, 1
      %vm1055 = vcmp.eq.s32.totalorder %v1052, 2
      %vm1056 = vcmp.eq.s32.totalorder %v1052, 3
      %v1057 = vstv %s1050
      %v1058 = vsel %vm1056, %v1057, 0.0
      %v1059 = vstv %s1038
      %v1060 = vsel %vm1055, %v1059, %v1058
      %v1061 = vstv %s1027
      %v1062 = vsel %vm1054, %v1061, %v1060
      %v1063 = vstv %s1016
      %v1064 = vsel %vm1053, %v1063, %v1062
      %1065 = vst [vmem:[#allocation6] sm:$0xff] %v1064
    $region29: #{tpu_custom_call.1} parent=1 // pred_fallthru
      _
    // Predicated region
    $region30: #{tpu_custom_call.1} parent=1 // pred_check
      _
    $region31: #{tpu_custom_call.1} parent=1 // pred_check_branch
      %1067 = sbr.rel (0) target = $region33
    $region32: #{tpu_custom_call.1} parent=1 // pred_region
      %s1069 = ssub.s32 128, 128
      %1070 = vsyncadd [#allocation7], %s1069
      %s1072 = sshll.u32 [#allocation6], 4
      %s1073 = int_to_ptr.vmem [resolvable:$true] %s1072
      %1075 = dma.vmem_to_hbm [thread:$0]  %s1073, 128, %s4, [#allocation7]
    $region33: #{tpu_custom_call.1} parent=1 // pred_fallthru
      _
    // Predicated region
    $region34: #{tpu_custom_call.1} parent=1 // pred_check
      _
    $region35: #{tpu_custom_call.1} parent=1 // pred_check_branch
      %1077 = sbr.rel (0) target = $region37
    $region36: #{tpu_custom_call.1} parent=1 // pred_region
      %1078 = dma.done [#allocation7], 128
    $region37: #{tpu_custom_call.1} parent=1 // pred_fallthru
      _
    %1079 = vsyncpa [#allocation7], 1

</llo_original>
